<compile_context>
chip_gen: v7x
topology: tpu7x:2x2x1
jax: 0.10.0
libtpu: 0.0.40
codegen_flags: <defaults>
</compile_context>

<pallas_src>
import jax
import jax.numpy as jnp
from jax.experimental import pallas as pl
from jax.experimental.pallas import tpu as pltpu


def _round_up(x, m):
    return ((x + m - 1) // m) * m


def _linear_kernel(x_ref, w_ref, b_ref, o_ref):
    # x_ref: (tile, C), w_ref: (C, B), b_ref: (1, B), o_ref: (tile, B)
    acc = jnp.dot(x_ref[...], w_ref[...], preferred_element_type=jnp.float32)
    o_ref[...] = (acc + b_ref[...].astype(jnp.float32)).astype(o_ref.dtype)


def pae_logits_pallas(pair, weight, bias, *, row_tile=4096):
    """Linear projection of the pair representation to PAE logits.

    pair:   [N1, N2, C]  float32
    weight: [C, B]       float32  (transposed vs torch's [B, C])
    bias:   [B]          float32
    returns logits [N1, N2, B] float32
    """
    n1, n2, c = pair.shape
    b = weight.shape[1]
    m = n1 * n2

    # Row tile: big enough to amortize per-step pipeline overhead, multiple of
    # 8 (sublane), capped so the grid has >= 2 steps (v7x has 2 TCs and the
    # "parallel" row axis is what shards work across them).
    tile = max(8, min(row_tile, _round_up(pl.cdiv(m, 2), 8)))
    grid = (pl.cdiv(m, tile),)

    x = pair.reshape(m, c)          # contiguous reshape: free
    bias2d = bias.reshape(1, b)

    cost = pl.CostEstimate(
        flops=2 * m * c * b,
        transcendentals=0,
        bytes_accessed=(m * c * x.dtype.itemsize          # activations read
                        + c * b * weight.dtype.itemsize   # weight read (once)
                        + b * bias.dtype.itemsize         # bias read (once)
                        + m * b * 4),                     # logits written
    )

    # VMEM budget: double-buffered x tile + out tile, plus resident weight/bias.
    vmem_need = 2 * tile * (c + b) * 4 + c * b * 4 + b * 4
    vmem_limit = None
    if vmem_need > (14 << 20):      # beyond v5e's 16 MiB default scoped VMEM
        vmem_limit = min(int(vmem_need * 2), 64 << 20)

    out = pl.pallas_call(
        _linear_kernel,
        out_shape=jax.ShapeDtypeStruct((m, b), jnp.float32),
        grid_spec=pltpu.PrefetchScalarGridSpec(
            num_scalar_prefetch=0,
            grid=grid,
            in_specs=[
                pl.BlockSpec((tile, c), lambda i: (i, 0)),  # row tiles of pair
                pl.BlockSpec((c, b), lambda i: (0, 0)),     # full weight (resident)
                pl.BlockSpec((1, b), lambda i: (0, 0)),     # bias (resident)
            ],
            out_specs=pl.BlockSpec((tile, b), lambda i: (i, 0)),
        ),
        compiler_params=pltpu.CompilerParams(
            dimension_semantics=("parallel",),   # row grid shards across TCs
            vmem_limit_bytes=vmem_limit,
        ),
        cost_estimate=cost,
    )(x, weight, bias2d)

    return out.reshape(n1, n2, b)


class PredictedAlignedErrorPallas:
    """Mirror of the PyTorch module; parameters initialized deterministically."""

    def __init__(self, pair_channel, num_bins, max_error_bin, key):
        self.num_bins = num_bins
        self.max_error_bin = max_error_bin
        kw, kb = jax.random.split(key)
        # nn.Linear default init: U(-1/sqrt(fan_in), 1/sqrt(fan_in))
        bound = 1.0 / jnp.sqrt(pair_channel)
        # torch weight is [num_bins, pair_channel]; store transposed for the matmul
        self.weight = jax.random.uniform(
            kw, (pair_channel, num_bins), jnp.float32, -bound, bound
        )
        self.bias = jax.random.uniform(
            kb, (num_bins,), jnp.float32, -bound, bound
        )

    def __call__(self, representations):
        act = representations["pair"]
        logits = pae_logits_pallas(act, self.weight, self.bias)
        # TODO(synk): breaks is a trivial host-constant; kept in plain JAX.
        breaks = jnp.linspace(0.0, self.max_error_bin, self.num_bins - 1)
        return logits, breaks


if __name__ == "__main__":
    key = jax.random.PRNGKey(0)
    k_pair, k_params = jax.random.split(key)

    # Small synthetic config: N_res=8, pair_channel=32, num_bins=16, max_error_bin=31.0
    N, PAIR_CHANNEL, NUM_BINS, MAX_ERROR_BIN = 8, 32, 16, 31.0

    pair = jax.random.normal(k_pair, (N, N, PAIR_CHANNEL), jnp.float32)
    module = PredictedAlignedErrorPallas(PAIR_CHANNEL, NUM_BINS, MAX_ERROR_BIN, k_params)

    logits, breaks = module({"pair": pair})
    logits = jax.block_until_ready(logits)
    breaks = jax.block_until_ready(breaks)

    # Sanity check against plain-JAX reference
    ref = pair @ module.weight + module.bias
    assert logits.shape == (N, N, NUM_BINS)
    assert breaks.shape == (NUM_BINS - 1,)
    assert jnp.allclose(logits, ref, atol=1e-5, rtol=1e-5)

    # Exercise a shape where N*N is NOT a multiple of the row tile (odd N ->
    # odd N^2) to validate the cdiv / masked-partial-block path.
    N2 = 9
    pair2 = jax.random.normal(jax.random.PRNGKey(7), (N2, N2, PAIR_CHANNEL), jnp.float32)
    logits2 = jax.block_until_ready(
        pae_logits_pallas(pair2, module.weight, module.bias)
    )
    ref2 = pair2 @ module.weight + module.bias
    assert logits2.shape == (N2, N2, NUM_BINS)
    assert jnp.allclose(logits2, ref2, atol=1e-5, rtol=1e-5)

    print("KERNEL_OK")
</pallas_src>

<mosaic_0001>
module attributes {stable_mosaic.version = 11 : i64} {
  func.func @_linear_kernel(%arg0: i32, %arg1: memref<32x32xf32, #tpu.memory_space<vmem>>, %arg2: memref<32x16xf32, #tpu.memory_space<vmem>>, %arg3: memref<1x16xf32, #tpu.memory_space<vmem>>, %arg4: memref<32x16xf32, #tpu.memory_space<vmem>>) attributes {dimension_semantics = [#tpu.dimension_semantics<parallel>], iteration_bounds = array<i64: 2>, scalar_prefetch = 0 : i64, scratch_operands = 0 : i64, tpu.core_type = #tpu.core_type<tc>, window_params = [{transform_indices = @transform_0, window_bounds = array<i64: 32, 32>}, {pipeline_mode = #tpu.pipeline_mode<synchronous>, transform_indices = @transform_1, window_bounds = array<i64: 32, 16>}, {pipeline_mode = #tpu.pipeline_mode<synchronous>, transform_indices = @transform_2, window_bounds = array<i64: 1, 16>}, {transform_indices = @transform_3, window_bounds = array<i64: 32, 16>}]} {
    %c0 = arith.constant 0 : index
    %c0_0 = arith.constant 0 : index
    %0 = vector.load %arg1[%c0, %c0_0] : memref<32x32xf32, #tpu.memory_space<vmem>>, vector<32x32xf32>
    %c0_1 = arith.constant 0 : index
    %c0_2 = arith.constant 0 : index
    %1 = vector.load %arg2[%c0_1, %c0_2] : memref<32x16xf32, #tpu.memory_space<vmem>>, vector<32x16xf32>
    %cst = arith.constant dense<0.000000e+00> : vector<32x16xf32>
    %2 = tpu.matmul %0, %1, %cst {dimension_numbers = #tpu.dot_dimension_numbers<[1], [0], [0], [1], [0, 0, 1, 1], [], []>} : vector<32x32xf32>, vector<32x16xf32>, vector<32x16xf32> -> vector<32x16xf32>
    %c0_3 = arith.constant 0 : index
    %c0_4 = arith.constant 0 : index
    %3 = vector.load %arg3[%c0_3, %c0_4] : memref<1x16xf32, #tpu.memory_space<vmem>>, vector<1x16xf32>
    %4 = vector.broadcast %3 : vector<1x16xf32> to vector<32x16xf32>
    %5 = arith.addf %2, %4 : vector<32x16xf32>
    %c0_5 = arith.constant 0 : index
    %c0_6 = arith.constant 0 : index
    %6 = vector.load %arg4[%c0_5, %c0_6] : memref<32x16xf32, #tpu.memory_space<vmem>>, vector<32x16xf32>
    tpu.vector_store %arg4[%c0_5, %c0_6], %5 {strides = array<i32>} : memref<32x16xf32, #tpu.memory_space<vmem>>, vector<32x16xf32>,
    return
  }
  func.func @transform_0(%arg0: i32) -> (i32, i32) {
    %c0_i32 = arith.constant 0 : i32
    %c0_i32_0 = arith.constant 0 : i32
    return %arg0, %c0_i32 : i32, i32
  }
  func.func @transform_1(%arg0: i32) -> (i32, i32) {
    %c0_i32 = arith.constant 0 : i32
    %c0_i32_0 = arith.constant 0 : i32
    %c0_i32_1 = arith.constant 0 : i32
    return %c0_i32, %c0_i32_0 : i32, i32
  }
  func.func @transform_2(%arg0: i32) -> (i32, i32) {
    %c0_i32 = arith.constant 0 : i32
    %c0_i32_0 = arith.constant 0 : i32
    %c0_i32_1 = arith.constant 0 : i32
    return %c0_i32, %c0_i32_0 : i32, i32
  }
  func.func @transform_3(%arg0: i32) -> (i32, i32) {
    %c0_i32 = arith.constant 0 : i32
    %c0_i32_0 = arith.constant 0 : i32
    return %arg0, %c0_i32 : i32, i32
  }
}

</mosaic_0001>

<llo_original>
// kernel: tpu_custom_call.1
$region0: #{tpu_custom_call.1}
  #allocation0 [shape = 'u32[]', space=smem, size = 0x4, offset = 0x4, fixed_abs, tag = 'smem constant byte address 0x4 - core index']
  #allocation1 [shape = 'u32[144,128]{1,0:T(1,128)}', space=vmem, size = 0x12000, scoped, tag = 'internal scratch']
  %s0 = inlined_call_operand.vmem [shape: f32[64,32], index: 0, kind: input, shape index: {}]
  %s1 = inlined_call_operand.vmem [shape: f32[32,16], index: 1, kind: input, shape index: {}]
  %s2 = inlined_call_operand.vmem [shape: f32[1,16], index: 2, kind: input, shape index: {}]
  %s3 = inlined_call_operand.vmem [shape: f32[64,16], index: 3, kind: output, shape index: {}]
  %s4 = sld [smem:[#allocation0]]
  $region45: #{tpu_custom_call.1} parent=0
    _
  %s6 = ssub.s32 1, %s4
  %s7 = scalar_select 0, %s6, %s4
  loop: start=0, step=1, limit=4
  $region2: #{tpu_custom_call.1} parent=0 // loop_pre_header
    _
  $region3: #{tpu_custom_call.1} parent=0 // loop_header
    %s9 = sphi 0, %s13
    %p10 = scmp.ge.s32.totalorder %s9, 4
    %s19 = sphi 0, %s21
    %s22 = sphi 0, %s19
    %s23 = sphi 0, %s22
    %s39 = sphi 0, %s23
    %s43 = sphi 0, %s43
    %s45 = sphi 0, %s43
    %s46 = sphi 0, %s45
    %s60 = sphi 0, %s46
    %s64 = sphi 0, %s64
    %s66 = sphi 0, %s64
    %s67 = sphi 0, %s66
    %s81 = sphi 0, %s67
    %s87 = sphi 0, %s89
    %s90 = sphi 0, %s87
    %s91 = sphi 0, %s90
    %s107 = sphi 0, %s91
  $region4: #{tpu_custom_call.1} parent=0 // loop_header_branch
    %12 = sbr.rel (%p10) target = $region8
  $region5: #{tpu_custom_call.1} parent=0 // loop_body
    %s14 = ssub.s32 %s9, 1
    %s15 = ssub.s32 %s9, 2
    %s16 = sadd.s32 %s9, 1
    %s17 = ssub.s32 %s9, %s16
    %p18 = scmp.eq.s32.totalorder %s17, 0
    %s20 = sadd.s32 %s19, 1
    %s21 = scalar_select %p18, %s19, %s20
    %p24 = pneg %p18
    %p25 = scmp.eq.s32.totalorder %s9, 1
    %p26 = por %p24, %p25
    %p27 = scmp.ne.s32.totalorder %s19, %s22
    %p28 = scmp.eq.s32.totalorder %s9, 0
    %p29 = por %p27, %p28
    %p30 = scmp.ne.s32.totalorder %s19, %s22
    %p31 = scmp.eq.s32.totalorder %s14, 1
    %p32 = por %p30, %p31
    %p33 = scmp.ne.s32.totalorder %s22, %s23
    %p34 = scmp.eq.s32.totalorder %s14, 0
    %p35 = por %p33, %p34
    %p36 = scmp.ne.s32.totalorder %s22, %s23
    %p37 = scmp.eq.s32.totalorder %s15, 1
    %p38 = por %p36, %p37
    %p40 = scmp.ne.s32.totalorder %s23, %s39
    %p41 = scmp.eq.s32.totalorder %s15, 0
    %p42 = por %p40, %p41
    %s44 = sadd.s32 %s43, 1
    %p47 = scmp.eq.s32.totalorder %s9, 1
    %p48 = scmp.ne.s32.totalorder %s43, %s45
    %p49 = scmp.eq.s32.totalorder %s9, 0
    %p50 = por %p48, %p49
    %p51 = scmp.ne.s32.totalorder %s43, %s45
    %p52 = scmp.eq.s32.totalorder %s14, 1
    %p53 = por %p51, %p52
    %p54 = scmp.ne.s32.totalorder %s45, %s46
    %p55 = scmp.eq.s32.totalorder %s14, 0
    %p56 = por %p54, %p55
    %p57 = scmp.ne.s32.totalorder %s45, %s46
    %p58 = scmp.eq.s32.totalorder %s15, 1
    %p59 = por %p57, %p58
    %p61 = scmp.ne.s32.totalorder %s46, %s60
    %p62 = scmp.eq.s32.totalorder %s15, 0
    %p63 = por %p61, %p62
    %s65 = sadd.s32 %s64, 1
    %p68 = scmp.eq.s32.totalorder %s9, 1
    %p69 = scmp.ne.s32.totalorder %s64, %s66
    %p70 = scmp.eq.s32.totalorder %s9, 0
    %p71 = por %p69, %p70
    %p72 = scmp.ne.s32.totalorder %s64, %s66
    %p73 = scmp.eq.s32.totalorder %s14, 1
    %p74 = por %p72, %p73
    %p75 = scmp.ne.s32.totalorder %s66, %s67
    %p76 = scmp.eq.s32.totalorder %s14, 0
    %p77 = por %p75, %p76
    %p78 = scmp.ne.s32.totalorder %s66, %s67
    %p79 = scmp.eq.s32.totalorder %s15, 1
    %p80 = por %p78, %p79
    %p82 = scmp.ne.s32.totalorder %s67, %s81
    %p83 = scmp.eq.s32.totalorder %s15, 0
    %p84 = por %p82, %p83
    %s85 = ssub.s32 %s9, %s16
    %p86 = scmp.eq.s32.totalorder %s85, 0
    %s88 = sadd.s32 %s87, 1
    %s89 = scalar_select %p86, %s87, %s88
    %p92 = pneg %p86
    %p93 = scmp.eq.s32.totalorder %s9, 1
    %p94 = por %p92, %p93
    %p95 = scmp.ne.s32.totalorder %s87, %s90
    %p96 = scmp.eq.s32.totalorder %s9, 0
    %p97 = por %p95, %p96
    %p98 = scmp.ne.s32.totalorder %s87, %s90
    %p99 = scmp.eq.s32.totalorder %s14, 1
    %p100 = por %p98, %p99
    %p101 = scmp.ne.s32.totalorder %s90, %s91
    %p102 = scmp.eq.s32.totalorder %s14, 0
    %p103 = por %p101, %p102
    %p104 = scmp.ne.s32.totalorder %s90, %s91
    %p105 = scmp.eq.s32.totalorder %s15, 1
    %p106 = por %p104, %p105
    %p108 = scmp.ne.s32.totalorder %s91, %s107
    %p109 = scmp.eq.s32.totalorder %s15, 0
    %p110 = por %p108, %p109
    %p111 = scmp.le.s32.totalorder 1, %s9
    %p112 = scmp.lt.s32.totalorder %s9, 3
    %p113 = pnand %p111, %p112
    %p114 = pneg %p113
    // Predicated region
    $region9: #{tpu_custom_call.1} parent=5 // pred_check
      _
    $region10: #{tpu_custom_call.1} parent=5 // pred_check_branch
      %116 = sbr.rel (%p113) target = $region12
    $region11: #{tpu_custom_call.1} parent=5 // pred_region
      %s117 = ssub.s32 %s9, 1
      // Predicated region
      $region13: #{tpu_custom_call.1} parent=11 // pred_check
        %p118 = pneg %p56
      $region14: #{tpu_custom_call.1} parent=11 // pred_check_branch
        %120 = sbr.rel (%p118) target = $region16
      $region15: #{tpu_custom_call.1} parent=11 // pred_region
        _
      $region16: #{tpu_custom_call.1} parent=11 // pred_fallthru
        _
      // Predicated region
      $region17: #{tpu_custom_call.1} parent=11 // pred_check
        %p121 = pneg %p77
      $region18: #{tpu_custom_call.1} parent=11 // pred_check_branch
        %123 = sbr.rel (%p121) target = $region20
      $region19: #{tpu_custom_call.1} parent=11 // pred_region
        _
      $region20: #{tpu_custom_call.1} parent=11 // pred_fallthru
        _
    $region12: #{tpu_custom_call.1} parent=5 // pred_fallthru
      _
    %p124 = scmp.lt.s32.totalorder %s9, 2
    // Predicated region
    $region21: #{tpu_custom_call.1} parent=5 // pred_check
      %p125 = pneg %p124
    $region22: #{tpu_custom_call.1} parent=5 // pred_check_branch
      %127 = sbr.rel (%p125) target = $region24
    $region23: #{tpu_custom_call.1} parent=5 // pred_region
      // Predicated region
      $region25: #{tpu_custom_call.1} parent=23 // pred_check
        %p128 = pneg %p29
      $region26: #{tpu_custom_call.1} parent=23 // pred_check_branch
        %130 = sbr.rel (%p128) target = $region28
      $region27: #{tpu_custom_call.1} parent=23 // pred_region
        %s131 = smul.u32 4, %s9
        %p132 = scmp.lt.s32.totalorder %s131, 7
        %s133 = scalar_select %p132, %s131, 7
        %s134 = smul.addr %s133, 8
        %s135 = scalar_lea.vmem %s0, %s134
        %s136 = smul.u32 4, %s9
      $region28: #{tpu_custom_call.1} parent=23 // pred_fallthru
        _
    $region24: #{tpu_custom_call.1} parent=5 // pred_fallthru
      _
    %p137 = scmp.le.s32.totalorder 1, %s9
    %p138 = scmp.lt.s32.totalorder %s9, 3
    %p139 = pnand %p137, %p138
    %p140 = pneg %p139
    // Predicated region
    $region29: #{tpu_custom_call.1} parent=5 // pred_check
      _
    $region30: #{tpu_custom_call.1} parent=5 // pred_check_branch
      %142 = sbr.rel (%p139) target = $region32
    $region31: #{tpu_custom_call.1} parent=5 // pred_region
      %s143 = ssub.s32 %s9, 1
      %s144 = smul.u32 4, %s14
      %p145 = scmp.lt.s32.totalorder %s144, 7
      %s146 = scalar_select %p145, %s144, 7
      %s147 = smul.addr %s146, 8
      %s148 = scalar_lea.vmem %s0, %s147
      %p149 = pneg %p35
      %p150 = pneg %p32
      %p151 = pneg %p56
      %p152 = pneg %p53
      %p153 = pneg %p77
      %p154 = pneg %p74
      %p155 = pneg %p103
      %p156 = pneg %p100
      %s157 = smul.u32 4, %s14
      %p158 = scmp.lt.s32.totalorder %s157, 7
      %s159 = scalar_select %p158, %s157, 7
      %s160 = smul.addr %s159, 8
      %s161 = scalar_lea.vmem %s3, %s160
      %s162 = smul.u32 4, %s14
      %p163 = scmp.lt.s32.totalorder %s162, 7
      %s164 = scalar_select %p163, %s162, 7
      %s165 = smul.addr %s164, 8
      %s166 = scalar_lea.vmem %s0, %s165
      %s167 = smul.u32 4, %s14
      %s168 = smul.u32 4, %s14
      %p169 = scmp.lt.s32.totalorder %s168, 7
      %s170 = scalar_select %p169, %s168, 7
      %s171 = smul.addr %s170, 8
      %s172 = scalar_lea.vmem %s3, %s171
      %s173 = smul.u32 4, %s14
      %v174 = vld [vmem:[%s166] sm:$0xff]
      %v175 = vld [vmem:[%s166 + $0x8] sm:$0xff]
      %v176 = vld [vmem:[%s166 + $0x10] sm:$0xff]
      %v177 = vld [vmem:[%s166 + $0x18] sm:$0xff]
      %v178 = vld [vmem:[%s1] sm:$0xff]
      %v179 = vld [vmem:[%s1 + $0x8] sm:$0xff]
      %v180 = vld [vmem:[%s1 + $0x10] sm:$0xff]
      %v181 = vld [vmem:[%s1 + $0x18] sm:$0xff]
      %v182 = vld [vmem:[%s2] sm:$0x1]
      %v184 = vlaneseq
      %v185 = vshrl.u32 %v184, 7
      %v186 = vsub.s32 0, %v185
      %v187 = vrot.slane %v182, %v186
      %vm189 = vcmask 261120
      %v191 = vsel %vm189, %v174, 0
      %v194 = vsel %vm189, %v175, 0
      %v197 = vsel %vm189, %v176, 0
      %v200 = vsel %vm189, %v177, 0
      %202 = vmatprep.subr.mxu0 0.0
      %203 = vmatpush1.msra.mxu0 %v178
      %204 = vmatprep.subr.mxu0 0.0
      %205 = vmatpush1.msra.mxu0 %v179
      %206 = vmatprep.subr.mxu0 0.0
      %207 = vmatpush1.msra.mxu0 %v180
      %208 = vmatprep.subr.mxu0 0.0
      %209 = vmatpush1.msra.mxu0 %v181
      %210 = vmatprep.subr.mxu0 0.0
      %211 = vmatpush1.msra.mxu0 0.0
      %212 = vmatprep.subr.mxu0 0.0
      %213 = vmatpush1.msra.mxu0 0.0
      %214 = vmatprep.subr.mxu0 0.0
      %215 = vmatpush1.msra.mxu0 0.0
      %216 = vmatprep.subr.mxu0 0.0
      %217 = vmatpush1.msra.mxu0 0.0
      %218 = vmatprep.subr.mxu0 0.0
      %219 = vmatpush1.msra.mxu0 0.0
      %220 = vmatprep.subr.mxu0 0.0
      %221 = vmatpush1.msra.mxu0 0.0
      %222 = vmatprep.subr.mxu0 0.0
      %223 = vmatpush1.msra.mxu0 0.0
      %224 = vmatprep.subr.mxu0 0.0
      %225 = vmatpush1.msra.mxu0 0.0
      %226 = vmatprep.subr.mxu0 0.0
      %227 = vmatpush1.msra.mxu0 0.0
      %228 = vmatprep.subr.mxu0 0.0
      %229 = vmatpush1.msra.mxu0 0.0
      %230 = vmatprep.subr.mxu0 0.0
      %231 = vmatpush1.msra.mxu0 0.0
      %232 = vmatprep.subr.mxu0 0.0
      %233 = vmatpush1.msra.mxu0 0.0
      %234 = vmatprep.subr.mxu0 0.0
      %235 = vmatpush1.msra.mxu0 0.0
      %236 = vmatprep.subr.mxu0 0.0
      %237 = vmatpush1.msra.mxu0 0.0
      %238 = vmatprep.subr.mxu0 0.0
      %239 = vmatpush1.msra.mxu0 0.0
      %240 = vmatprep.subr.mxu0 0.0
      %241 = vmatpush1.msra.mxu0 0.0
      %242 = vmatprep.subr.mxu0 0.0
      %243 = vmatpush1.msra.mxu0 0.0
      %244 = vmatprep.subr.mxu0 0.0
      %245 = vmatpush1.msra.mxu0 0.0
      %246 = vmatprep.subr.mxu0 0.0
      %247 = vmatpush1.msra.mxu0 0.0
      %248 = vmatprep.subr.mxu0 0.0
      %249 = vmatpush1.msra.mxu0 0.0
      %250 = vmatprep.subr.mxu0 0.0
      %251 = vmatpush1.msra.mxu0 0.0
      %252 = vmatprep.subr.mxu0 0.0
      %253 = vmatpush1.msra.mxu0 0.0
      %254 = vmatprep.subr.mxu0 0.0
      %255 = vmatpush1.msra.mxu0 0.0
      %256 = vmatprep.subr.mxu0 0.0
      %257 = vmatpush1.msra.mxu0 0.0
      %258 = vmatprep.subr.mxu0 0.0
      %259 = vmatpush1.msra.mxu0 0.0
      %260 = vmatprep.subr.mxu0 0.0
      %261 = vmatpush1.msra.mxu0 0.0
      %262 = vmatprep.subr.mxu0 0.0
      %263 = vmatpush1.msra.mxu0 0.0
      %264 = vmatprep.subr.mxu0 0.0
      %265 = vmatpush1.msra.mxu0 0.0
      %266 = vmatprep.mubr.f32.mxu0 0.0
      %267 = vmatmul.mubr.f32.gmra.mrb[0].mxu0 %v191
      %v268 = vpop.f32.mrb[0].mxu0
      %v269 = vadd.f32 %v187, %v268
      %v270 = vpop.f32.mrb[0].mxu0
      %271 = vmatprep.mubr.f32.mxu0 0.0
      %272 = vmatmul.mubr.f32.gmra.mrb[0].mxu0 %v194
      %v273 = vpop.f32.mrb[0].mxu0
      %v274 = vadd.f32 %v187, %v273
      %v275 = vpop.f32.mrb[0].mxu0
      %276 = vmatprep.mubr.f32.mxu0 0.0
      %277 = vmatmul.mubr.f32.gmra.mrb[0].mxu0 %v197
      %v278 = vpop.f32.mrb[0].mxu0
      %v279 = vadd.f32 %v187, %v278
      %v280 = vpop.f32.mrb[0].mxu0
      %281 = vmatprep.mubr.f32.mxu0 0.0
      %282 = vmatmul.mubr.f32.gmra.mrb[0].mxu0 %v200
      %v283 = vpop.f32.mrb[0].mxu0
      %v284 = vadd.f32 %v187, %v283
      %v285 = vpop.f32.mrb[0].mxu0
      %286 = vdwg.mxu0
      %vm287 = vcmask 130048
      %288 = vst.msk [vmem:[%s172] sm:$0xff] %vm287, %v269
      %289 = vst.msk [vmem:[%s172 + $0x8] sm:$0xff] %vm287, %v274
      %290 = vst.msk [vmem:[%s172 + $0x10] sm:$0xff] %vm287, %v279
      %291 = vst.msk [vmem:[%s172 + $0x18] sm:$0xff] %vm287, %v284
      %s292 = smul.u32 4, %s14
      %p293 = scmp.lt.s32.totalorder %s292, 7
      %s294 = scalar_select %p293, %s292, 7
      %s295 = smul.addr %s294, 8
      %s296 = scalar_lea.vmem %s3, %s295
      // Predicated region
      $region33: #{tpu_custom_call.1} parent=31 // pred_check
        %p297 = pneg %p100
      $region34: #{tpu_custom_call.1} parent=31 // pred_check_branch
        %299 = sbr.rel (%p297) target = $region36
      $region35: #{tpu_custom_call.1} parent=31 // pred_region
        %s300 = smul.u32 4, %s14
      $region36: #{tpu_custom_call.1} parent=31 // pred_fallthru
        _
    $region32: #{tpu_custom_call.1} parent=5 // pred_fallthru
      _
    %p301 = scmp.le.s32.totalorder 2, %s9
    // Predicated region
    $region37: #{tpu_custom_call.1} parent=5 // pred_check
      %p302 = pneg %p301
    $region38: #{tpu_custom_call.1} parent=5 // pred_check_branch
      %304 = sbr.rel (%p302) target = $region40
    $region39: #{tpu_custom_call.1} parent=5 // pred_region
      %s305 = ssub.s32 %s9, 2
      // Predicated region
      $region41: #{tpu_custom_call.1} parent=39 // pred_check
        %p306 = pneg %p106
      $region42: #{tpu_custom_call.1} parent=39 // pred_check_branch
        %308 = sbr.rel (%p306) target = $region44
      $region43: #{tpu_custom_call.1} parent=39 // pred_region
        %s309 = smul.u32 4, %s15
        %p310 = scmp.lt.s32.totalorder %s309, 7
        %s311 = scalar_select %p310, %s309, 7
        %s312 = smul.addr %s311, 8
        %s313 = scalar_lea.vmem %s3, %s312
      $region44: #{tpu_custom_call.1} parent=39 // pred_fallthru
        _
    $region40: #{tpu_custom_call.1} parent=5 // pred_fallthru
      _
  $region6: #{tpu_custom_call.1} parent=0 // loop_footer
    %s13 = sadd.s32 1, %s9
  $region7: #{tpu_custom_call.1} parent=0 // loop_footer_branch
    %8 = sbr.rel target = $region3
  $region8: #{tpu_custom_call.1} parent=0 // loop_exit
    _

</llo_original>
